<compile_context>
chip_gen: v7x
topology: tpu7x:2x2x1
jax: 0.10.0
libtpu: 0.0.40
codegen_flags: <defaults>
</compile_context>

<pallas_src>
import functools

import jax
import jax.numpy as jnp
from jax.experimental import pallas as pl
from jax.experimental.pallas import tpu as pltpu

# ----------------------------- configuration -------------------------------
NUM_MODALITIES = 3
BATCH = 2
IN_FEATURES = 32
OUT_FEATURES = 128     # lane-dense output (multiple of 128)


# ------------------------------ Pallas kernel -------------------------------
def _expert_product_kernel(x_ref, w_ref, b_ref, o_ref, *, num_modalities, batch):
    """Fused ExpertProduct.

    x_ref: [M*B, K]  all modalities stacked along the row (sublane) axis
    w_ref: [K, N]    expert1 weight, stored input-major (== torch weight.T)
    b_ref: [1, N]
    o_ref: [B, N]
    """
    # One MXU matmul for all modalities at once (same RHS weight), one bias
    # broadcast.  f32 accumulation.
    y = jnp.dot(x_ref[...], w_ref[...], preferred_element_type=jnp.float32) + b_ref[...]

    # Cross-modality product via static sublane slices -> plain VPU multiplies.
    prod = y[0:batch, :]
    for i in range(1, num_modalities):
        prod = prod * y[i * batch:(i + 1) * batch, :]
    o_ref[...] = prod


def expert_product(modalities, w, b):
    """modalities: [M, B, K] float32, w: [K, N] float32, b: [N] float32 -> [B, N]."""
    m, batch, k = modalities.shape
    k2, n = w.shape
    assert k == k2, "in_features mismatch between modalities and weight"
    assert m >= 1, "need at least one modality"
    assert modalities.dtype == jnp.float32 and w.dtype == jnp.float32 and b.dtype == jnp.float32, (
        "expert_product expects float32 inputs (no wrapper-side casts)")

    # Free metadata reshapes on contiguous arrays (done outside the kernel so
    # no in-kernel VMEM relayout is materialized).
    x2d = modalities.reshape(m * batch, k)
    b2d = b.reshape(1, n)

    flops = 2 * m * batch * k * n + (m - 1) * batch * n
    bytes_accessed = 4 * (m * batch * k + k * n + n + batch * n)

    kernel = functools.partial(_expert_product_kernel, num_modalities=m, batch=batch)
    return pl.pallas_call(
        kernel,
        out_shape=jax.ShapeDtypeStruct((batch, n), jnp.float32),
        in_specs=[pl.BlockSpec(memory_space=pltpu.MemorySpace.VMEM)] * 3,
        out_specs=pl.BlockSpec(memory_space=pltpu.MemorySpace.VMEM),
        cost_estimate=pl.CostEstimate(
            flops=flops, transcendentals=0, bytes_accessed=bytes_accessed),
    )(x2d, w, b2d)


# ------------------------- pure-JAX reference (check) -----------------------
def _ref_expert_product(modalities, w, b):
    y = jnp.einsum("mbk,kn->mbn", modalities, w) + b.reshape(1, 1, -1)
    return jnp.prod(y, axis=0)


# ---------------------------------- main -------------------------------------
if __name__ == "__main__":
    key = jax.random.PRNGKey(0)
    k_x, k_w, k_b = jax.random.split(key, 3)

    # modalities stacked as a single [M, B, K] tensor (the torch code indexes
    # modalities[i]; a stacked tensor is the natural dense equivalent).
    modalities = jax.random.normal(
        k_x, (NUM_MODALITIES, BATCH, IN_FEATURES), dtype=jnp.float32
    )
    # expert1 weight stored [in, out] (== torch weight.T), bias [out].
    w = (0.1 * jax.random.normal(k_w, (IN_FEATURES, OUT_FEATURES))).astype(jnp.float32)
    b = (0.1 * jax.random.normal(k_b, (OUT_FEATURES,))).astype(jnp.float32)

    fwd = jax.jit(expert_product)
    out = fwd(modalities, w, b)
    jax.block_until_ready(out)

    ref = _ref_expert_product(modalities, w, b)
    assert out.shape == (BATCH, OUT_FEATURES)
    if not jnp.allclose(out, ref, rtol=1e-4, atol=1e-5):
        raise AssertionError("Pallas ExpertProduct mismatch vs JAX reference")

    print("KERNEL_OK")
</pallas_src>

<mosaic_0001>
module attributes {stable_mosaic.version = 11 : i64} {
  func.func @_expert_product_kernel(%arg0: memref<6x32xf32, #tpu.memory_space<vmem>>, %arg1: memref<32x128xf32, #tpu.memory_space<vmem>>, %arg2: memref<1x128xf32, #tpu.memory_space<vmem>>, %arg3: memref<2x128xf32, #tpu.memory_space<vmem>>) attributes {dimension_semantics = [], scalar_prefetch = 0 : i64, scratch_operands = 0 : i64, tpu.core_type = #tpu.core_type<tc>} {
    %c0 = arith.constant 0 : index
    %c0_0 = arith.constant 0 : index
    %0 = vector.load %arg0[%c0, %c0_0] : memref<6x32xf32, #tpu.memory_space<vmem>>, vector<6x32xf32>
    %c0_1 = arith.constant 0 : index
    %c0_2 = arith.constant 0 : index
    %1 = vector.load %arg1[%c0_1, %c0_2] : memref<32x128xf32, #tpu.memory_space<vmem>>, vector<32x128xf32>
    %cst = arith.constant dense<0.000000e+00> : vector<6x128xf32>
    %2 = tpu.matmul %0, %1, %cst {dimension_numbers = #tpu.dot_dimension_numbers<[1], [0], [0], [1], [0, 0, 1, 1], [], []>} : vector<6x32xf32>, vector<32x128xf32>, vector<6x128xf32> -> vector<6x128xf32>
    %c0_3 = arith.constant 0 : index
    %c0_4 = arith.constant 0 : index
    %3 = vector.load %arg2[%c0_3, %c0_4] : memref<1x128xf32, #tpu.memory_space<vmem>>, vector<1x128xf32>
    %4 = vector.broadcast %3 : vector<1x128xf32> to vector<6x128xf32>
    %5 = arith.addf %2, %4 : vector<6x128xf32>
    %6 = vector.extract_strided_slice %5 {offsets = [0, 0], sizes = [2, 128], strides = [1, 1]} : vector<6x128xf32> to vector<2x128xf32>
    %7 = vector.extract_strided_slice %5 {offsets = [2, 0], sizes = [2, 128], strides = [1, 1]} : vector<6x128xf32> to vector<2x128xf32>
    %8 = arith.mulf %6, %7 : vector<2x128xf32>
    %9 = vector.extract_strided_slice %5 {offsets = [4, 0], sizes = [2, 128], strides = [1, 1]} : vector<6x128xf32> to vector<2x128xf32>
    %10 = arith.mulf %8, %9 : vector<2x128xf32>
    %c0_5 = arith.constant 0 : index
    %c0_6 = arith.constant 0 : index
    %11 = vector.load %arg3[%c0_5, %c0_6] : memref<2x128xf32, #tpu.memory_space<vmem>>, vector<2x128xf32>
    tpu.vector_store %arg3[%c0_5, %c0_6], %10 {strides = array<i32>} : memref<2x128xf32, #tpu.memory_space<vmem>>, vector<2x128xf32>,
    return
  }
}

</mosaic_0001>

<llo_original>
// kernel: expert_product.1
$region0: #{expert_product.1}
  #allocation0 [shape = 'u32[]', space=smem, size = 0x4, offset = 0x4, fixed_abs, tag = 'smem constant byte address 0x4 - core index']
  #allocation1 [shape = 'u32[144,128]{1,0:T(1,128)}', space=vmem, size = 0x12000, scoped, tag = 'internal scratch']
  %s0 = inlined_call_operand.vmem [shape: f32[6,32], index: 0, kind: input, shape index: {}]
  %s1 = inlined_call_operand.hbm [shape: f32[32,128], index: 1, kind: input, shape index: {}]
  %s2 = inlined_call_operand.vmem [shape: f32[1,128], index: 2, kind: input, shape index: {}]
  %s3 = inlined_call_operand.hbm [shape: f32[2,128], index: 3, kind: output, shape index: {}]
  %s4 = sld [smem:[#allocation0]]
  $region26: #{expert_product.1} parent=0
    _
  %s6 = ssub.s32 1, %s4
  %s7 = scalar_select 0, %s6, %s4
  $region1: #{expert_product.1} parent=0
    #allocation2 [shape = 'u8[16384]{0}', space=vmem, size = 0x4000, scoped, tag = 'input window, operand 1, single buffered']
    #allocation3 [shape = 's32[1]{0}', space=sflag, size = 0x4, scoped, tag = 'scoped memory for expert_product.1']
    #allocation4 [shape = 's32[1]{0}', space=sflag, size = 0x4, scoped, tag = 'scoped memory for expert_product.1']
    #allocation5 [shape = 'u8[1024]{0}', space=vmem, size = 0x400, scoped, tag = 'output window, operand 0, single buffered']
    %8 = vsyncpa [#allocation3], 0
    %9 = vsyncpa [#allocation4], 0
    // Predicated region
    $region2: #{expert_product.1} parent=1 // pred_check
      _
    $region3: #{expert_product.1} parent=1 // pred_check_branch
      %11 = sbr.rel (0) target = $region5
    $region4: #{expert_product.1} parent=1 // pred_region
      _
    $region5: #{expert_product.1} parent=1 // pred_fallthru
      _
    // Predicated region
    $region6: #{expert_product.1} parent=1 // pred_check
      _
    $region7: #{expert_product.1} parent=1 // pred_check_branch
      %13 = sbr.rel (0) target = $region9
    $region8: #{expert_product.1} parent=1 // pred_region
      %s15 = ssub.s32 512, 512
      %16 = vsyncadd [#allocation3], %s15
      %s17 = sshll.u32 [#allocation2], 4
      %s18 = int_to_ptr.vmem [resolvable:$true] %s17
      %23 = dma.hbm_to_vmem [thread:$0]  %s1, 512, %s18, [#allocation3], 128, 128, 8
    $region9: #{expert_product.1} parent=1 // pred_fallthru
      _
    // Predicated region
    $region10: #{expert_product.1} parent=1 // pred_check
      _
    $region11: #{expert_product.1} parent=1 // pred_check_branch
      %25 = sbr.rel (0) target = $region13
    $region12: #{expert_product.1} parent=1 // pred_region
      _
    $region13: #{expert_product.1} parent=1 // pred_fallthru
      _
    // Predicated region
    $region14: #{expert_product.1} parent=1 // pred_check
      _
    $region15: #{expert_product.1} parent=1 // pred_check_branch
      %27 = sbr.rel (0) target = $region17
    $region16: #{expert_product.1} parent=1 // pred_region
      %28 = dma.done [#allocation3], 512
    $region17: #{expert_product.1} parent=1 // pred_fallthru
      _
    %v29 = vld [vmem:[%s0] sm:$0x3f]
    %v30 = vld [vmem:[#allocation2] sm:$0xff]
    %v31 = vld [vmem:[#allocation2 + $0x8] sm:$0xff]
    %v32 = vld [vmem:[#allocation2 + $0x10] sm:$0xff]
    %v33 = vld [vmem:[#allocation2 + $0x18] sm:$0xff]
    %v34 = vld [vmem:[%s2] sm:$0x1]
    %v36 = vlaneseq
    %v37 = vshrl.u32 %v36, 7
    %v38 = vsub.s32 0, %v37
    %v39 = vrot.slane %v34, %v38
    %vm41 = vcmask 261120
    %v43 = vsel %vm41, %v29, 0
    %45 = vmatprep.subr.mxu0 0.0
    %46 = vmatpush1.msra.mxu0 %v30
    %47 = vmatprep.subr.mxu0 0.0
    %48 = vmatpush1.msra.mxu0 %v31
    %49 = vmatprep.subr.mxu0 0.0
    %50 = vmatpush1.msra.mxu0 %v32
    %51 = vmatprep.subr.mxu0 0.0
    %52 = vmatpush1.msra.mxu0 %v33
    %53 = vmatprep.subr.mxu0 0.0
    %54 = vmatpush1.msra.mxu0 0.0
    %55 = vmatprep.subr.mxu0 0.0
    %56 = vmatpush1.msra.mxu0 0.0
    %57 = vmatprep.subr.mxu0 0.0
    %58 = vmatpush1.msra.mxu0 0.0
    %59 = vmatprep.subr.mxu0 0.0
    %60 = vmatpush1.msra.mxu0 0.0
    %61 = vmatprep.subr.mxu0 0.0
    %62 = vmatpush1.msra.mxu0 0.0
    %63 = vmatprep.subr.mxu0 0.0
    %64 = vmatpush1.msra.mxu0 0.0
    %65 = vmatprep.subr.mxu0 0.0
    %66 = vmatpush1.msra.mxu0 0.0
    %67 = vmatprep.subr.mxu0 0.0
    %68 = vmatpush1.msra.mxu0 0.0
    %69 = vmatprep.subr.mxu0 0.0
    %70 = vmatpush1.msra.mxu0 0.0
    %71 = vmatprep.subr.mxu0 0.0
    %72 = vmatpush1.msra.mxu0 0.0
    %73 = vmatprep.subr.mxu0 0.0
    %74 = vmatpush1.msra.mxu0 0.0
    %75 = vmatprep.subr.mxu0 0.0
    %76 = vmatpush1.msra.mxu0 0.0
    %77 = vmatprep.subr.mxu0 0.0
    %78 = vmatpush1.msra.mxu0 0.0
    %79 = vmatprep.subr.mxu0 0.0
    %80 = vmatpush1.msra.mxu0 0.0
    %81 = vmatprep.subr.mxu0 0.0
    %82 = vmatpush1.msra.mxu0 0.0
    %83 = vmatprep.subr.mxu0 0.0
    %84 = vmatpush1.msra.mxu0 0.0
    %85 = vmatprep.subr.mxu0 0.0
    %86 = vmatpush1.msra.mxu0 0.0
    %87 = vmatprep.subr.mxu0 0.0
    %88 = vmatpush1.msra.mxu0 0.0
    %89 = vmatprep.subr.mxu0 0.0
    %90 = vmatpush1.msra.mxu0 0.0
    %91 = vmatprep.subr.mxu0 0.0
    %92 = vmatpush1.msra.mxu0 0.0
    %93 = vmatprep.subr.mxu0 0.0
    %94 = vmatpush1.msra.mxu0 0.0
    %95 = vmatprep.subr.mxu0 0.0
    %96 = vmatpush1.msra.mxu0 0.0
    %97 = vmatprep.subr.mxu0 0.0
    %98 = vmatpush1.msra.mxu0 0.0
    %99 = vmatprep.subr.mxu0 0.0
    %100 = vmatpush1.msra.mxu0 0.0
    %101 = vmatprep.subr.mxu0 0.0
    %102 = vmatpush1.msra.mxu0 0.0
    %103 = vmatprep.subr.mxu0 0.0
    %104 = vmatpush1.msra.mxu0 0.0
    %105 = vmatprep.subr.mxu0 0.0
    %106 = vmatpush1.msra.mxu0 0.0
    %107 = vmatprep.subr.mxu0 0.0
    %108 = vmatpush1.msra.mxu0 0.0
    %109 = vmatprep.mubr.f32.mxu0 0.0
    %110 = vmatmul.mubr.f32.gmra.mrb[0].mxu0 %v43
    %v111 = vpop.f32.mrb[0].mxu0
    %v112 = vadd.f32 %v39, %v111
    %v113 = vpop.f32.mrb[0].mxu0
    %114 = vdwg.mxu0
    %v116 = vrot.slane %v112, 2
    %v118 = vmul.f32 %v112, %v116
    %v119 = vrot.slane %v112, 4
    %v121 = vmul.f32 %v118, %v119
    %122 = vst [vmem:[#allocation5] sm:$0x3] %v121
    // Predicated region
    $region18: #{expert_product.1} parent=1 // pred_check
      _
    $region19: #{expert_product.1} parent=1 // pred_check_branch
      %124 = sbr.rel (0) target = $region21
    $region20: #{expert_product.1} parent=1 // pred_region
      %s126 = ssub.s32 32, 32
      %127 = vsyncadd [#allocation4], %s126
      %s129 = sshll.u32 [#allocation5], 4
      %s130 = int_to_ptr.vmem [resolvable:$true] %s129
      %132 = dma.vmem_to_hbm [thread:$0]  %s130, 32, %s3, [#allocation4]
    $region21: #{expert_product.1} parent=1 // pred_fallthru
      _
    // Predicated region
    $region22: #{expert_product.1} parent=1 // pred_check
      _
    $region23: #{expert_product.1} parent=1 // pred_check_branch
      %134 = sbr.rel (0) target = $region25
    $region24: #{expert_product.1} parent=1 // pred_region
      %135 = dma.done [#allocation4], 32
    $region25: #{expert_product.1} parent=1 // pred_fallthru
      _
    %136 = vsyncpa [#allocation3], 1
    %137 = vsyncpa [#allocation4], 1

</llo_original>
